<compile_context>
chip_gen: v6e
topology: v6e:2x2x1
jax: 0.10.0
libtpu: 0.0.40
codegen_flags: <defaults>
</compile_context>

<pallas_src>
import jax
import jax.numpy as jnp
from jax.experimental import pallas as pl
from jax.experimental.pallas import tpu as pltpu


def _downsample_kernel(x_ref, w_ref, bias_ref, o_ref):
    # x_ref:    (Cin, TP)   subsampled pixels of one image (spatial on lanes)
    # w_ref:    (Cout, Cin) 1x1 conv weight with BN scale folded in
    # bias_ref: (Cout, 1)   folded BN bias (f32), broadcast across lanes
    # o_ref:    (Cout, TP)
    y = jnp.dot(w_ref[...], x_ref[...], preferred_element_type=jnp.float32)
    o_ref[...] = (y + bias_ref[...]).astype(o_ref.dtype)


def downsample_forward(x_nchw, mask, conv_weight, gamma, beta, run_mean, run_var,
                       stride: int, eps: float = 1e-5):
    """x_nchw: (N, Cin, H, W). conv_weight: (Cout, Cin, 1, 1). Returns (y_nchw, mask)."""
    n, cin, h, w = x_nchw.shape
    cout = conv_weight.shape[0]
    itemsize = jnp.dtype(x_nchw.dtype).itemsize

    # stride-s 1x1 conv == subsample the spatial grid, then per-pixel channel mixing.
    # This slice+reshape producer is marked fusible into the pallas_call input DMA
    # (allow_input_fusion below) so it need not round-trip through HBM.
    xs = x_nchw[:, :, ::stride, ::stride]                  # (N, Cin, Ho, Wo)
    ho, wo = xs.shape[2], xs.shape[3]
    p = ho * wo
    x3 = xs.reshape(n, cin, p)                             # stays NCHW-ordered

    # fold BatchNorm (inference) into the weight + a per-channel bias
    scale = gamma.astype(jnp.float32) / jnp.sqrt(run_var.astype(jnp.float32) + eps)
    w_mat = conv_weight.reshape(cout, cin).astype(jnp.float32) * scale[:, None]
    w_mat = w_mat.astype(x_nchw.dtype)                     # keep model dtype (bf16 stays bf16)
    bias = (beta.astype(jnp.float32)
            - run_mean.astype(jnp.float32) * scale).reshape(cout, 1)

    # ---- spatial tiling: size against a VMEM byte budget, lane-dense tiles ----
    TP_ALIGN = 128
    budget_bytes = 20 << 20                                # double-buffered x+out tile budget
    tp_cap = budget_bytes // max(1, 2 * (cin + cout) * itemsize)
    tp_cap = max(TP_ALIGN, (min(int(tp_cap), 8192) // TP_ALIGN) * TP_ALIGN)

    if p <= tp_cap:
        if n >= 2 or p < 2 * TP_ALIGN:
            tp = p                                         # single full-extent spatial tile
        else:
            # N == 1: split P so both v7x TensorCores get work / pipeline has >= 2 steps
            tp = max(TP_ALIGN, (pl.cdiv(p, 2) // TP_ALIGN) * TP_ALIGN)
    else:
        tp = tp_cap                                        # multiple of 128 -> lane-dense
    grid_p = pl.cdiv(p, tp)

    # explicit scoped-VMEM limit (v5e default is only 16 MiB)
    tile_bytes = 2 * (cin + cout) * tp * itemsize          # double-buffered in + out tiles
    resident_bytes = cout * cin * itemsize + cout * 4
    vmem_limit = int(min(max(tile_bytes + resident_bytes + (8 << 20), 16 << 20), 48 << 20))

    cost = pl.CostEstimate(
        flops=2 * n * cout * cin * p,
        transcendentals=0,
        bytes_accessed=int(n * cin * p * itemsize + cout * cin * itemsize
                           + cout * 4 + n * cout * p * itemsize))

    out3 = pl.pallas_call(
        _downsample_kernel,
        out_shape=jax.ShapeDtypeStruct((n, cout, p), x_nchw.dtype),
        grid_spec=pltpu.PrefetchScalarGridSpec(
            num_scalar_prefetch=0,
            grid=(n, grid_p),
            in_specs=[
                pl.BlockSpec((None, cin, tp), lambda i, j: (i, 0, j)),  # x tile
                pl.BlockSpec((cout, cin), lambda i, j: (0, 0)),         # folded weight (resident)
                pl.BlockSpec((cout, 1), lambda i, j: (0, 0)),           # folded bias (resident)
            ],
            out_specs=pl.BlockSpec((None, cout, tp), lambda i, j: (i, 0, j)),
        ),
        compiler_params=pltpu.CompilerParams(
            dimension_semantics=("parallel", "parallel"),
            vmem_limit_bytes=vmem_limit,
            allow_input_fusion=[True, False, False],       # fuse the ::stride subsample in
        ),
        cost_estimate=cost,
    )(x3, w_mat, bias)

    y = out3.reshape(n, cout, ho, wo)                      # free reshape back to NCHW
    # kernel_size == (1,1) in MaskedConv2d -> mask is returned unchanged (per the PyTorch spec)
    return y, mask


def _reference(x_nchw, mask, conv_weight, gamma, beta, run_mean, run_var, stride, eps=1e-5):
    xs = x_nchw[:, :, ::stride, ::stride]
    y = jnp.einsum("nchw,oc->nohw", xs, conv_weight.reshape(conv_weight.shape[0], -1))
    scale = gamma / jnp.sqrt(run_var + eps)
    y = y * scale[None, :, None, None] + (beta - run_mean * scale)[None, :, None, None]
    return y, mask


if __name__ == "__main__":
    key = jax.random.PRNGKey(0)
    k1, k2 = jax.random.split(key)

    N, Cin, H, W = 2, 4, 16, 16
    Cout, stride = 8, 2

    x = jax.random.normal(k1, (N, Cin, H, W), dtype=jnp.float32)
    mask = jnp.ones((N, 1, H, W), dtype=jnp.float32)

    # deterministic parameter init (synthetic; matches nn.Conv2d / nn.BatchNorm2d shapes)
    conv_weight = jax.random.normal(k2, (Cout, Cin, 1, 1), dtype=jnp.float32) * 0.1
    gamma = jnp.linspace(0.5, 1.5, Cout, dtype=jnp.float32)
    beta = jnp.linspace(-0.2, 0.2, Cout, dtype=jnp.float32)
    run_mean = jnp.linspace(-0.1, 0.1, Cout, dtype=jnp.float32)
    run_var = jnp.linspace(0.5, 2.0, Cout, dtype=jnp.float32)

    y, m_out = downsample_forward(x, mask, conv_weight, gamma, beta,
                                  run_mean, run_var, stride)
    jax.block_until_ready(y)

    y_ref, _ = _reference(x, mask, conv_weight, gamma, beta, run_mean, run_var, stride)
    assert y.shape == (N, Cout, H // stride, W // stride)
    assert jnp.allclose(y, y_ref, atol=1e-4, rtol=1e-4)
    assert jnp.array_equal(m_out, mask)

    print("KERNEL_OK")
</pallas_src>

<mosaic_0001>
module attributes {stable_mosaic.version = 11 : i64} {
  func.func @_downsample_kernel(%arg0: i32, %arg1: i32, %arg2: memref<1x4x64xf32, #tpu.memory_space<vmem>>, %arg3: memref<8x4xf32, #tpu.memory_space<vmem>>, %arg4: memref<8x1xf32, #tpu.memory_space<vmem>>, %arg5: memref<1x8x64xf32, #tpu.memory_space<vmem>>) attributes {dimension_semantics = [#tpu.dimension_semantics<parallel>, #tpu.dimension_semantics<parallel>], iteration_bounds = array<i64: 2, 1>, scalar_prefetch = 0 : i64, scratch_operands = 0 : i64, tpu.core_type = #tpu.core_type<tc>, window_params = [{transform_indices = @transform_0, window_bounds = array<i64: 1, 4, 64>}, {pipeline_mode = #tpu.pipeline_mode<synchronous>, transform_indices = @transform_1, window_bounds = array<i64: 8, 4>}, {pipeline_mode = #tpu.pipeline_mode<synchronous>, transform_indices = @transform_2, window_bounds = array<i64: 8, 1>}, {transform_indices = @transform_3, window_bounds = array<i64: 1, 8, 64>}]} {
    %c0 = arith.constant 0 : index
    %c0_0 = arith.constant 0 : index
    %0 = vector.load %arg3[%c0, %c0_0] : memref<8x4xf32, #tpu.memory_space<vmem>>, vector<8x4xf32>
    %c0_1 = arith.constant 0 : index
    %c0_2 = arith.constant 0 : index
    %c0_3 = arith.constant 0 : index
    %1 = vector.load %arg2[%c0_1, %c0_2, %c0_3] : memref<1x4x64xf32, #tpu.memory_space<vmem>>, vector<1x4x64xf32>
    %2 = vector.shape_cast %1 : vector<1x4x64xf32> to vector<4x64xf32>
    %cst = arith.constant dense<0.000000e+00> : vector<8x64xf32>
    %3 = tpu.matmul %0, %2, %cst {dimension_numbers = #tpu.dot_dimension_numbers<[1], [0], [0], [1], [0, 0, 1, 1], [], []>} : vector<8x4xf32>, vector<4x64xf32>, vector<8x64xf32> -> vector<8x64xf32>
    %c0_4 = arith.constant 0 : index
    %c0_5 = arith.constant 0 : index
    %4 = vector.load %arg4[%c0_4, %c0_5] : memref<8x1xf32, #tpu.memory_space<vmem>>, vector<8x1xf32>
    %5 = vector.broadcast %4 : vector<8x1xf32> to vector<8x64xf32>
    %6 = arith.addf %3, %5 : vector<8x64xf32>
    %c0_6 = arith.constant 0 : index
    %c0_7 = arith.constant 0 : index
    %c0_8 = arith.constant 0 : index
    %7 = vector.load %arg5[%c0_6, %c0_7, %c0_8] : memref<1x8x64xf32, #tpu.memory_space<vmem>>, vector<1x8x64xf32>
    %8 = vector.shape_cast %7 : vector<1x8x64xf32> to vector<8x64xf32>
    %9 = vector.shape_cast %6 : vector<8x64xf32> to vector<1x8x64xf32>
    tpu.vector_store %arg5[%c0_6, %c0_7, %c0_8], %9 {strides = array<i32>} : memref<1x8x64xf32, #tpu.memory_space<vmem>>, vector<1x8x64xf32>,
    return
  }
  func.func @transform_0(%arg0: i32, %arg1: i32) -> (i32, i32, i32) {
    %c0_i32 = arith.constant 0 : i32
    %c0_i32_0 = arith.constant 0 : i32
    return %arg0, %c0_i32, %arg1 : i32, i32, i32
  }
  func.func @transform_1(%arg0: i32, %arg1: i32) -> (i32, i32) {
    %c0_i32 = arith.constant 0 : i32
    %c0_i32_0 = arith.constant 0 : i32
    %c0_i32_1 = arith.constant 0 : i32
    return %c0_i32, %c0_i32_0 : i32, i32
  }
  func.func @transform_2(%arg0: i32, %arg1: i32) -> (i32, i32) {
    %c0_i32 = arith.constant 0 : i32
    %c0_i32_0 = arith.constant 0 : i32
    %c0_i32_1 = arith.constant 0 : i32
    return %c0_i32, %c0_i32_0 : i32, i32
  }
  func.func @transform_3(%arg0: i32, %arg1: i32) -> (i32, i32, i32) {
    %c0_i32 = arith.constant 0 : i32
    %c0_i32_0 = arith.constant 0 : i32
    return %arg0, %c0_i32, %arg1 : i32, i32, i32
  }
}

</mosaic_0001>

<llo_original>
// kernel: tpu_custom_call.1
$region0: #{tpu_custom_call.1}
  #allocation0 [shape = 'u32[]', space=smem, size = 0x4, offset = 0x4, fixed_abs, tag = 'smem constant byte address 0x4 - core index']
  #allocation1 [shape = 'u32[144,128]{1,0:T(1,128)}', space=vmem, size = 0x12000, scoped, tag = 'internal scratch']
  %s0 = inlined_call_operand.vmem [shape: f32[2,4,64], index: 0, kind: input, shape index: {}]
  %s1 = inlined_call_operand.vmem [shape: f32[8,4], index: 1, kind: input, shape index: {}]
  %s2 = inlined_call_operand.vmem [shape: f32[8,1], index: 2, kind: input, shape index: {}]
  %s3 = inlined_call_operand.hbm [shape: f32[2,8,64], index: 3, kind: output, shape index: {}]
  %s4 = sld [smem:[#allocation0]]
  $region45: #{tpu_custom_call.1} parent=0
    _
  %s6 = ssub.s32 1, %s4
  %s7 = scalar_select 0, %s6, %s4
  $region1: #{tpu_custom_call.1} parent=0
    #allocation2 [shape = 'u8[8192]{0}', space=vmem, size = 0x2000, scoped, tag = 'output window, operand 0']
    #allocation3 [shape = 's32[2]{0}', space=sflag, size = 0x8, scoped, tag = 'scoped memory for tpu_custom_call.1']
    %8 = vsyncpa [#allocation3], 0
    %s9 = scalar_lea.sflag [#allocation3], 1
    %10 = vsyncpa %s9, 0
    loop: start=0, step=1, limit=4
    $region2: #{tpu_custom_call.1} parent=1 // loop_pre_header
      _
    $region3: #{tpu_custom_call.1} parent=1 // loop_header
      %s12 = sphi 0, %s16
      %p13 = scmp.ge.s32.totalorder %s12, 4
      %s19 = sphi 0, %s31
      %s20 = sphi 0, %s27
      %s21 = sphi 0, %s19
      %s22 = sphi 0, %s20
      %s23 = sphi 0, %s21
      %s24 = sphi 0, %s22
      %s36 = sphi 0, %s38
      %s39 = sphi 0, %s36
      %s40 = sphi 0, %s39
      %s56 = sphi 0, %s40
      %s60 = sphi 0, %s60
      %s62 = sphi 0, %s60
      %s63 = sphi 0, %s62
      %s77 = sphi 0, %s63
      %s81 = sphi 0, %s81
      %s83 = sphi 0, %s81
      %s84 = sphi 0, %s83
      %s98 = sphi 0, %s84
      %s106 = sphi 0, %s108
      %s109 = sphi 0, %s106
      %s110 = sphi 0, %s109
      %s126 = sphi 0, %s110
    $region4: #{tpu_custom_call.1} parent=1 // loop_header_branch
      %15 = sbr.rel (%p13) target = $region8
    $region5: #{tpu_custom_call.1} parent=1 // loop_body
      %s17 = ssub.s32 %s12, 1
      %s18 = ssub.s32 %s12, 2
      %s25 = sadd.s32 1, %s20
      %p26 = scmp.ge.s32.totalorder %s25, 1
      %s27 = scalar_select %p26, 0, %s25
      %s28 = sadd.s32 1, %s19
      %s29 = scalar_select %p26, %s28, %s19
      %p30 = scmp.ge.s32.totalorder %s29, 2
      %s31 = scalar_select %p30, 0, %s29
      %s32 = ssub.s32 %s19, %s31
      %s33 = ssub.s32 %s20, %s27
      %s34 = sor.u32 %s32, %s33
      %p35 = scmp.eq.s32.totalorder %s34, 0
      %s37 = sadd.s32 %s36, 1
      %s38 = scalar_select %p35, %s36, %s37
      %p41 = pneg %p35
      %p42 = scmp.eq.s32.totalorder %s12, 1
      %p43 = por %p41, %p42
      %p44 = scmp.ne.s32.totalorder %s36, %s39
      %p45 = scmp.eq.s32.totalorder %s12, 0
      %p46 = por %p44, %p45
      %p47 = scmp.ne.s32.totalorder %s36, %s39
      %p48 = scmp.eq.s32.totalorder %s17, 1
      %p49 = por %p47, %p48
      %p50 = scmp.ne.s32.totalorder %s39, %s40
      %p51 = scmp.eq.s32.totalorder %s17, 0
      %p52 = por %p50, %p51
      %p53 = scmp.ne.s32.totalorder %s39, %s40
      %p54 = scmp.eq.s32.totalorder %s18, 1
      %p55 = por %p53, %p54
      %p57 = scmp.ne.s32.totalorder %s40, %s56
      %p58 = scmp.eq.s32.totalorder %s18, 0
      %p59 = por %p57, %p58
      %s61 = sadd.s32 %s60, 1
      %p64 = scmp.eq.s32.totalorder %s12, 1
      %p65 = scmp.ne.s32.totalorder %s60, %s62
      %p66 = scmp.eq.s32.totalorder %s12, 0
      %p67 = por %p65, %p66
      %p68 = scmp.ne.s32.totalorder %s60, %s62
      %p69 = scmp.eq.s32.totalorder %s17, 1
      %p70 = por %p68, %p69
      %p71 = scmp.ne.s32.totalorder %s62, %s63
      %p72 = scmp.eq.s32.totalorder %s17, 0
      %p73 = por %p71, %p72
      %p74 = scmp.ne.s32.totalorder %s62, %s63
      %p75 = scmp.eq.s32.totalorder %s18, 1
      %p76 = por %p74, %p75
      %p78 = scmp.ne.s32.totalorder %s63, %s77
      %p79 = scmp.eq.s32.totalorder %s18, 0
      %p80 = por %p78, %p79
      %s82 = sadd.s32 %s81, 1
      %p85 = scmp.eq.s32.totalorder %s12, 1
      %p86 = scmp.ne.s32.totalorder %s81, %s83
      %p87 = scmp.eq.s32.totalorder %s12, 0
      %p88 = por %p86, %p87
      %p89 = scmp.ne.s32.totalorder %s81, %s83
      %p90 = scmp.eq.s32.totalorder %s17, 1
      %p91 = por %p89, %p90
      %p92 = scmp.ne.s32.totalorder %s83, %s84
      %p93 = scmp.eq.s32.totalorder %s17, 0
      %p94 = por %p92, %p93
      %p95 = scmp.ne.s32.totalorder %s83, %s84
      %p96 = scmp.eq.s32.totalorder %s18, 1
      %p97 = por %p95, %p96
      %p99 = scmp.ne.s32.totalorder %s84, %s98
      %p100 = scmp.eq.s32.totalorder %s18, 0
      %p101 = por %p99, %p100
      %s102 = ssub.s32 %s19, %s31
      %s103 = ssub.s32 %s20, %s27
      %s104 = sor.u32 %s102, %s103
      %p105 = scmp.eq.s32.totalorder %s104, 0
      %s107 = sadd.s32 %s106, 1
      %s108 = scalar_select %p105, %s106, %s107
      %p111 = pneg %p105
      %p112 = scmp.eq.s32.totalorder %s12, 1
      %p113 = por %p111, %p112
      %p114 = scmp.ne.s32.totalorder %s106, %s109
      %p115 = scmp.eq.s32.totalorder %s12, 0
      %p116 = por %p114, %p115
      %p117 = scmp.ne.s32.totalorder %s106, %s109
      %p118 = scmp.eq.s32.totalorder %s17, 1
      %p119 = por %p117, %p118
      %p120 = scmp.ne.s32.totalorder %s109, %s110
      %p121 = scmp.eq.s32.totalorder %s17, 0
      %p122 = por %p120, %p121
      %p123 = scmp.ne.s32.totalorder %s109, %s110
      %p124 = scmp.eq.s32.totalorder %s18, 1
      %p125 = por %p123, %p124
      %p127 = scmp.ne.s32.totalorder %s110, %s126
      %p128 = scmp.eq.s32.totalorder %s18, 0
      %p129 = por %p127, %p128
      %p130 = scmp.le.s32.totalorder 1, %s12
      %p131 = scmp.lt.s32.totalorder %s12, 3
      %p132 = pnand %p130, %p131
      %p133 = pneg %p132
      // Predicated region
      $region9: #{tpu_custom_call.1} parent=5 // pred_check
        _
      $region10: #{tpu_custom_call.1} parent=5 // pred_check_branch
        %135 = sbr.rel (%p132) target = $region12
      $region11: #{tpu_custom_call.1} parent=5 // pred_region
        %s136 = ssub.s32 %s12, 1
        // Predicated region
        $region13: #{tpu_custom_call.1} parent=11 // pred_check
          %p137 = pneg %p73
        $region14: #{tpu_custom_call.1} parent=11 // pred_check_branch
          %139 = sbr.rel (%p137) target = $region16
        $region15: #{tpu_custom_call.1} parent=11 // pred_region
          _
        $region16: #{tpu_custom_call.1} parent=11 // pred_fallthru
          _
        // Predicated region
        $region17: #{tpu_custom_call.1} parent=11 // pred_check
          %p140 = pneg %p94
        $region18: #{tpu_custom_call.1} parent=11 // pred_check_branch
          %142 = sbr.rel (%p140) target = $region20
        $region19: #{tpu_custom_call.1} parent=11 // pred_region
          _
        $region20: #{tpu_custom_call.1} parent=11 // pred_fallthru
          _
      $region12: #{tpu_custom_call.1} parent=5 // pred_fallthru
        _
      %p143 = scmp.lt.s32.totalorder %s12, 2
      // Predicated region
      $region21: #{tpu_custom_call.1} parent=5 // pred_check
        %p144 = pneg %p143
      $region22: #{tpu_custom_call.1} parent=5 // pred_check_branch
        %146 = sbr.rel (%p144) target = $region24
      $region23: #{tpu_custom_call.1} parent=5 // pred_region
        // Predicated region
        $region25: #{tpu_custom_call.1} parent=23 // pred_check
          %p147 = pneg %p46
        $region26: #{tpu_custom_call.1} parent=23 // pred_check_branch
          %149 = sbr.rel (%p147) target = $region28
        $region27: #{tpu_custom_call.1} parent=23 // pred_region
          %p150 = scmp.lt.s32.totalorder %s19, 1
          %s151 = scalar_select %p150, %s19, 1
          %p152 = scmp.lt.s32.totalorder %s20, 0
          %s153 = scalar_select %p152, %s20, 0
          %s154 = sadd.s32 %s153, %s151
          %s155 = smul.addr %s154, 4
          %s156 = scalar_lea.vmem %s0, %s155
        $region28: #{tpu_custom_call.1} parent=23 // pred_fallthru
          _
      $region24: #{tpu_custom_call.1} parent=5 // pred_fallthru
        _
      %p157 = scmp.le.s32.totalorder 1, %s12
      %p158 = scmp.lt.s32.totalorder %s12, 3
      %p159 = pnand %p157, %p158
      %p160 = pneg %p159
      // Predicated region
      $region29: #{tpu_custom_call.1} parent=5 // pred_check
        _
      $region30: #{tpu_custom_call.1} parent=5 // pred_check_branch
        %162 = sbr.rel (%p159) target = $region32
      $region31: #{tpu_custom_call.1} parent=5 // pred_region
        %s163 = ssub.s32 %s12, 1
        %p164 = scmp.lt.s32.totalorder %s21, 1
        %s165 = scalar_select %p164, %s21, 1
        %p166 = scmp.lt.s32.totalorder %s22, 0
        %s167 = scalar_select %p166, %s22, 0
        %s168 = sadd.s32 %s167, %s165
        %s169 = smul.addr %s168, 4
        %s170 = scalar_lea.vmem %s0, %s169
        %p171 = pneg %p52
        %p172 = pneg %p49
        %p173 = pneg %p73
        %p174 = pneg %p70
        %p175 = pneg %p94
        %p176 = pneg %p91
        %p177 = pneg %p122
        %p178 = pneg %p119
        %s179 = sand.u32 %s109, 1
        %s180 = scalar_lea.sflag [#allocation3], %s179
        %s181 = sand.u32 %s109, 1
        %s182 = smul.addr %s181, 8
        %s183 = scalar_lea.vmem [#allocation2], %s182
        %p184 = scmp.lt.s32.totalorder %s21, 1
        %s185 = scalar_select %p184, %s21, 1
        %p186 = scmp.lt.s32.totalorder %s22, 0
        %s187 = scalar_select %p186, %s22, 0
        %s188 = sadd.s32 %s187, %s185
        %s189 = smul.addr %s188, 4
        %s190 = scalar_lea.vmem %s0, %s189
        %v191 = vld [vmem:[%s1] sm:$0xff]
        %v192 = vld [vmem:[%s190] sm:$0xf]
        %v193 = vld [vmem:[%s2] sm:$0xff]
        %195 = vset.pattern.permute.xlu0 0
        %196 = vperm.xlu0 %195, %v193
        %v197 = vpop.permute.xlu0 %196
        %vm199 = vcmask 31744
        %v201 = vsel %vm199, %v191, 0
        %vm203 = vcmask 1043456
        %v205 = vsel %vm203, %v192, 0
        %207 = vmatprep.subr.mxu0 0.0
        %208 = vmatpush1.msra.mxu0 0.0
        %209 = vmatprep.subr.mxu0 0.0
        %210 = vmatpush1.msra.mxu0 0.0
        %211 = vmatprep.subr.mxu0 0.0
        %212 = vmatpush1.msra.mxu0 0.0
        %213 = vmatprep.subr.mxu0 0.0
        %214 = vmatpush1.msra.mxu0 0.0
        %215 = vmatprep.subr.mxu0 0.0
        %216 = vmatpush1.msra.mxu0 0.0
        %217 = vmatprep.subr.mxu0 0.0
        %218 = vmatpush1.msra.mxu0 0.0
        %219 = vmatprep.subr.mxu0 0.0
        %220 = vmatpush1.msra.mxu0 0.0
        %221 = vmatprep.subr.mxu0 0.0
        %222 = vmatpush1.msra.mxu0 0.0
        %223 = vmatprep.subr.mxu0 0.0
        %224 = vmatpush1.msra.mxu0 0.0
        %225 = vmatprep.subr.mxu0 0.0
        %226 = vmatpush1.msra.mxu0 0.0
        %227 = vmatprep.subr.mxu0 0.0
        %228 = vmatpush1.msra.mxu0 0.0
        %229 = vmatprep.subr.mxu0 0.0
        %230 = vmatpush1.msra.mxu0 0.0
        %231 = vmatprep.subr.mxu0 0.0
        %232 = vmatpush1.msra.mxu0 0.0
        %233 = vmatprep.subr.mxu0 0.0
        %234 = vmatpush1.msra.mxu0 0.0
        %235 = vmatprep.subr.mxu0 0.0
        %236 = vmatpush1.msra.mxu0 0.0
        %237 = vmatprep.subr.mxu0 0.0
        %238 = vmatpush1.msra.mxu0 %v205
        %239 = vmatprep.subr.mxu0 0.0
        %240 = vmatpush2.msra.mxu0 0.0
        %241 = vmatprep.subr.mxu0 0.0
        %242 = vmatpush2.msra.mxu0 0.0
        %243 = vmatprep.subr.mxu0 0.0
        %244 = vmatpush2.msra.mxu0 0.0
        %245 = vmatprep.subr.mxu0 0.0
        %246 = vmatpush2.msra.mxu0 0.0
        %247 = vmatprep.subr.mxu0 0.0
        %248 = vmatpush2.msra.mxu0 0.0
        %249 = vmatprep.subr.mxu0 0.0
        %250 = vmatpush2.msra.mxu0 0.0
        %251 = vmatprep.subr.mxu0 0.0
        %252 = vmatpush2.msra.mxu0 0.0
        %253 = vmatprep.subr.mxu0 0.0
        %254 = vmatpush2.msra.mxu0 0.0
        %255 = vmatprep.subr.mxu0 0.0
        %256 = vmatpush2.msra.mxu0 0.0
        %257 = vmatprep.subr.mxu0 0.0
        %258 = vmatpush2.msra.mxu0 0.0
        %259 = vmatprep.subr.mxu0 0.0
        %260 = vmatpush2.msra.mxu0 0.0
        %261 = vmatprep.subr.mxu0 0.0
        %262 = vmatpush2.msra.mxu0 0.0
        %263 = vmatprep.subr.mxu0 0.0
        %264 = vmatpush2.msra.mxu0 0.0
        %265 = vmatprep.subr.mxu0 0.0
        %266 = vmatpush2.msra.mxu0 0.0
        %267 = vmatprep.subr.mxu0 0.0
        %268 = vmatpush2.msra.mxu0 0.0
        %269 = vmatprep.subr.mxu0 0.0
        %270 = vmatpush2.msra.mxu0 0.0
        %271 = vmatprep.mubr.f32.mxu0 0.0
        %272 = vmatmul.mubr.f32.gmra.mxu0 %v201
        %v273 = vpop.f32.mrf.mxu0
        %v274 = vadd.f32 %v197, %v273
        %v275 = vpop.f32.mrf.mxu0
        %276 = vdwg.mxu0
        %vm277 = vcmask 523264
        %278 = vst.msk [vmem:[%s183] sm:$0xff] %vm277, %v274
        %s279 = sand.u32 %s109, 1
        %s280 = scalar_lea.sflag [#allocation3], %s279
        %s281 = sand.u32 %s109, 1
        %s282 = smul.addr %s281, 8
        %s283 = scalar_lea.vmem [#allocation2], %s282
        // Predicated region
        $region33: #{tpu_custom_call.1} parent=31 // pred_check
          %p284 = pneg %p119
        $region34: #{tpu_custom_call.1} parent=31 // pred_check_branch
          %286 = sbr.rel (%p284) target = $region36
        $region35: #{tpu_custom_call.1} parent=31 // pred_region
          %s288 = ssub.s32 128, 128
          %289 = vsyncadd %s280, %s288
          %s290 = sadd.s32 %s22, %s21
          %s291 = smul.addr %s290, 128
          %s292 = scalar_lea.hbm %s3, %s291
          %s294 = sshll.u32 %s283, 4
          %s295 = int_to_ptr.vmem [resolvable:$true] %s294
          %297 = dma.vmem_to_hbm [thread:$0]  %s295, 128, %s292, %s280
        $region36: #{tpu_custom_call.1} parent=31 // pred_fallthru
          _
      $region32: #{tpu_custom_call.1} parent=5 // pred_fallthru
        _
      %p298 = scmp.le.s32.totalorder 2, %s12
      // Predicated region
      $region37: #{tpu_custom_call.1} parent=5 // pred_check
        %p299 = pneg %p298
      $region38: #{tpu_custom_call.1} parent=5 // pred_check_branch
        %301 = sbr.rel (%p299) target = $region40
      $region39: #{tpu_custom_call.1} parent=5 // pred_region
        %s302 = ssub.s32 %s12, 2
        // Predicated region
        $region41: #{tpu_custom_call.1} parent=39 // pred_check
          %p303 = pneg %p125
        $region42: #{tpu_custom_call.1} parent=39 // pred_check_branch
          %305 = sbr.rel (%p303) target = $region44
        $region43: #{tpu_custom_call.1} parent=39 // pred_region
          %s306 = sand.u32 %s110, 1
          %s307 = scalar_lea.sflag [#allocation3], %s306
          %s308 = sand.u32 %s110, 1
          %s309 = smul.addr %s308, 8
          %s310 = scalar_lea.vmem [#allocation2], %s309
          %311 = dma.done %s307, 128
        $region44: #{tpu_custom_call.1} parent=39 // pred_fallthru
          _
      $region40: #{tpu_custom_call.1} parent=5 // pred_fallthru
        _
    $region6: #{tpu_custom_call.1} parent=1 // loop_footer
      %s16 = sadd.s32 1, %s12
    $region7: #{tpu_custom_call.1} parent=1 // loop_footer_branch
      %11 = sbr.rel target = $region3
    $region8: #{tpu_custom_call.1} parent=1 // loop_exit
      _
    %312 = vsyncpa [#allocation3], 1
    %s313 = scalar_lea.sflag [#allocation3], 1
    %314 = vsyncpa %s313, 1

</llo_original>
